<compile_context>
chip_gen: v7x
topology: tpu7x:2x2x1
jax: 0.10.0
libtpu: 0.0.40
codegen_flags: <defaults>
</compile_context>

<pallas_src>
import jax
import jax.numpy as jnp
from jax.experimental import pallas as pl
from jax.experimental.pallas import tpu as pltpu


# ----------------------------------------------------------------------------
# Kernel 1: global-average-pool (as a tiled sum) + tiny 2-layer MLP -> s (C, 1)
# ----------------------------------------------------------------------------
def pool_mlp_kernel(feat_ref, w1_ref, b1_ref, w2_ref, b2_ref, s_ref, acc_ref):
    t = pl.program_id(1)

    @pl.when(t == 0)
    def _():
        acc_ref[...] = jnp.zeros_like(acc_ref)

    # feat_ref is (C, HW_TILE); accumulate the spatial sum (lane reduce -> XLU).
    acc_ref[...] += jnp.sum(feat_ref[...], axis=1, keepdims=True)

    @pl.when(t == pl.num_programs(1) - 1)
    def _():
        # 1/HW is folded into w1 by the wrapper, so acc is used directly.
        a = acc_ref[...]                                                    # (C, 1)
        h = jnp.dot(w1_ref[...], a, preferred_element_type=jnp.float32) + b1_ref[...]
        h = jnp.maximum(h, 0.0)                                             # (Cr, 1)
        z = jnp.dot(w2_ref[...], h, preferred_element_type=jnp.float32) + b2_ref[...]
        s_ref[...] = jax.nn.sigmoid(z).astype(s_ref.dtype)                  # (C, 1)


# ----------------------------------------------------------------------------
# Kernel 2: out = body * s, pure HBM-bandwidth scaling pass.
# ----------------------------------------------------------------------------
def scale_kernel(body_ref, s_ref, out_ref):
    # body_ref: (R_TILE, HW_TILE), s_ref: (R_TILE, 1) -> broadcast over lanes.
    out_ref[...] = (body_ref[...] * s_ref[...]).astype(out_ref.dtype)


# ----------------------------------------------------------------------------
# Wrapper
# ----------------------------------------------------------------------------
def fus_ca_layer(body, feat, w1, b1, w2, b2,
                 *, hw_tile_target=2048, tile_bytes_cap=2 * 1024 * 1024):
    """body, feat: (B, C, H, W) f32.  w1: (Cr, C), b1: (Cr, 1), w2: (C, Cr), b2: (C, 1)."""
    B, C, H, W = body.shape
    HW = H * W
    Cr = w1.shape[0]
    dtype = body.dtype
    itemsize = jnp.dtype(dtype).itemsize

    # --- lane-dense spatial tiling (multiple of 128), padded in the wrapper ---
    LANE = 128
    if HW <= hw_tile_target:
        HW_TILE = ((HW + LANE - 1) // LANE) * LANE
    else:
        HW_TILE = hw_tile_target
    HW_pad = ((HW + HW_TILE - 1) // HW_TILE) * HW_TILE
    n_hw = HW_pad // HW_TILE

    body2 = body.reshape(B, C, HW)
    feat2 = feat.reshape(B, C, HW)
    if HW_pad != HW:
        pad = ((0, 0), (0, 0), (0, HW_pad - HW))
        body2 = jnp.pad(body2, pad)   # padded lanes are sliced off after the kernel
        feat2 = jnp.pad(feat2, pad)   # zeros -> do not perturb the spatial sum

    # Fold the 1/HW of the average pool into w1 (pool kernel only sums).
    w1s = (w1 / float(HW)).astype(jnp.float32)

    vmem_limit = 32 * 1024 * 1024  # safe on v5e/v6e (128 MiB phys) and v7x (64 MiB phys)

    # ---------------- pass 1: attention vector s = (B, C, 1) ----------------
    s = pl.pallas_call(
        pool_mlp_kernel,
        out_shape=jax.ShapeDtypeStruct((B, C, 1), jnp.float32),
        grid_spec=pltpu.PrefetchScalarGridSpec(
            num_scalar_prefetch=0,
            grid=(B, n_hw),
            in_specs=[
                pl.BlockSpec((None, C, HW_TILE), lambda b, t: (b, 0, t)),   # feat tile
                pl.BlockSpec((Cr, C), lambda b, t: (0, 0)),                 # w1 (pre-scaled)
                pl.BlockSpec((Cr, 1), lambda b, t: (0, 0)),                 # b1
                pl.BlockSpec((C, Cr), lambda b, t: (0, 0)),                 # w2
                pl.BlockSpec((C, 1), lambda b, t: (0, 0)),                  # b2
            ],
            out_specs=pl.BlockSpec((None, C, 1), lambda b, t: (b, 0, 0)),
            scratch_shapes=[pltpu.VMEM((C, 1), jnp.float32)],
        ),
        compiler_params=pltpu.CompilerParams(
            dimension_semantics=("parallel", "arbitrary"),
            vmem_limit_bytes=vmem_limit,
        ),
    )(feat2, w1s, b1.astype(jnp.float32), w2.astype(jnp.float32), b2.astype(jnp.float32))

    # ---------------- pass 2: out = body * s (flattened, batch-folded) ----------------
    # Fold as many batch elements per block as fit under the VMEM tile cap.
    Bblk = 1
    for cand in range(B, 0, -1):
        if B % cand != 0:
            continue
        if cand * C * HW_TILE * itemsize > tile_bytes_cap:
            continue
        if (cand * C) % 8 != 0 and cand != B:   # keep sublane dim (8-)aligned
            continue
        Bblk = cand
        break
    R_TILE = Bblk * C

    body_flat = body2.reshape(B * C, HW_pad)
    s_flat = s.reshape(B * C, 1).astype(dtype)

    out_flat = pl.pallas_call(
        scale_kernel,
        out_shape=jax.ShapeDtypeStruct((B * C, HW_pad), dtype),
        grid_spec=pltpu.PrefetchScalarGridSpec(
            num_scalar_prefetch=0,
            grid=(B // Bblk, n_hw),
            in_specs=[
                pl.BlockSpec((R_TILE, HW_TILE), lambda r, t: (r, t)),       # body tile
                pl.BlockSpec((R_TILE, 1), lambda r, t: (r, 0)),             # per-(b,c) scale
            ],
            out_specs=pl.BlockSpec((R_TILE, HW_TILE), lambda r, t: (r, t)),
        ),
        compiler_params=pltpu.CompilerParams(
            dimension_semantics=("parallel", "parallel"),
            vmem_limit_bytes=vmem_limit,
        ),
    )(body_flat, s_flat)

    out = out_flat.reshape(B, C, HW_pad)
    if HW_pad != HW:
        out = out[:, :, :HW]
    return out.reshape(B, C, H, W)


# ----------------------------------------------------------------------------
# Pure-JAX reference matching the PyTorch module semantics.
# ----------------------------------------------------------------------------
def fus_ca_reference(body, feat, w1, b1, w2, b2):
    a = jnp.mean(feat, axis=(2, 3), keepdims=True)[:, :, 0, 0]     # (B, C)
    h = jnp.maximum(a @ w1.T + b1[:, 0], 0.0)                      # (B, Cr)
    s = jax.nn.sigmoid(h @ w2.T + b2[:, 0])                        # (B, C)
    return body * s[:, :, None, None]


if __name__ == "__main__":
    B, C, H, W = 2, 32, 16, 16
    reduction = 16
    Cr = C // reduction

    key = jax.random.PRNGKey(0)
    k_body, k_feat, k_w1, k_b1, k_w2, k_b2 = jax.random.split(key, 6)

    body = jax.random.normal(k_body, (B, C, H, W), dtype=jnp.float32)
    feat = jax.random.normal(k_feat, (B, C, H, W), dtype=jnp.float32)

    # Same shapes as nn.Conv2d(C, Cr, 1) / nn.Conv2d(Cr, C, 1), kaiming-uniform-ish.
    lim1 = 1.0 / (C ** 0.5)
    lim2 = 1.0 / (Cr ** 0.5)
    w1 = jax.random.uniform(k_w1, (Cr, C), jnp.float32, -lim1, lim1)
    b1 = jax.random.uniform(k_b1, (Cr, 1), jnp.float32, -lim1, lim1)
    w2 = jax.random.uniform(k_w2, (C, Cr), jnp.float32, -lim2, lim2)
    b2 = jax.random.uniform(k_b2, (C, 1), jnp.float32, -lim2, lim2)

    out = fus_ca_layer(body, feat, w1, b1, w2, b2)
    jax.block_until_ready(out)

    ref = fus_ca_reference(body, feat, w1, b1, w2, b2)
    assert out.shape == (B, C, H, W)
    assert jnp.allclose(out, ref, atol=1e-5, rtol=1e-5), "mismatch vs reference"

    print("KERNEL_OK")
</pallas_src>

<mosaic_0001>
module attributes {stable_mosaic.version = 11 : i64} {
  func.func @pool_mlp_kernel(%arg0: i32, %arg1: i32, %arg2: memref<1x32x256xf32, #tpu.memory_space<vmem>>, %arg3: memref<2x32xf32, #tpu.memory_space<vmem>>, %arg4: memref<2x1xf32, #tpu.memory_space<vmem>>, %arg5: memref<32x2xf32, #tpu.memory_space<vmem>>, %arg6: memref<32x1xf32, #tpu.memory_space<vmem>>, %arg7: memref<1x32x1xf32, #tpu.memory_space<vmem>>, %arg8: memref<32x1xf32, #tpu.memory_space<vmem>>) attributes {dimension_semantics = [#tpu.dimension_semantics<parallel>, #tpu.dimension_semantics<arbitrary>], iteration_bounds = array<i64: 2, 1>, scalar_prefetch = 0 : i64, scratch_operands = 1 : i64, tpu.core_type = #tpu.core_type<tc>, window_params = [{transform_indices = @transform_0, window_bounds = array<i64: 1, 32, 256>}, {pipeline_mode = #tpu.pipeline_mode<synchronous>, transform_indices = @transform_1, window_bounds = array<i64: 2, 32>}, {pipeline_mode = #tpu.pipeline_mode<synchronous>, transform_indices = @transform_2, window_bounds = array<i64: 2, 1>}, {pipeline_mode = #tpu.pipeline_mode<synchronous>, transform_indices = @transform_3, window_bounds = array<i64: 32, 2>}, {pipeline_mode = #tpu.pipeline_mode<synchronous>, transform_indices = @transform_4, window_bounds = array<i64: 32, 1>}, {transform_indices = @transform_5, window_bounds = array<i64: 1, 32, 1>}]} {
    %c0_i32 = arith.constant 0 : i32
    %0 = arith.cmpi eq, %arg1, %c0_i32 : i32
    %1 = arith.extui %0 : i1 to i32
    %c0_i32_0 = arith.constant 0 : i32
    %2 = arith.cmpi ne, %1, %c0_i32_0 : i32
    scf.if %2 {
      %cst_9 = arith.constant 0.000000e+00 : f32
      %13 = vector.broadcast %cst_9 : f32 to vector<32x1xf32>
      %c0_10 = arith.constant 0 : index
      %c0_11 = arith.constant 0 : index
      %14 = vector.load %arg8[%c0_10, %c0_11] : memref<32x1xf32, #tpu.memory_space<vmem>>, vector<32x1xf32>
      tpu.vector_store %arg8[%c0_10, %c0_11], %13 {strides = array<i32>} : memref<32x1xf32, #tpu.memory_space<vmem>>, vector<32x1xf32>,
    } else {
    }
    %c0 = arith.constant 0 : index
    %c0_1 = arith.constant 0 : index
    %3 = vector.load %arg8[%c0, %c0_1] : memref<32x1xf32, #tpu.memory_space<vmem>>, vector<32x1xf32>
    %c0_2 = arith.constant 0 : index
    %c0_3 = arith.constant 0 : index
    %c0_4 = arith.constant 0 : index
    %4 = vector.load %arg2[%c0_2, %c0_3, %c0_4] : memref<1x32x256xf32, #tpu.memory_space<vmem>>, vector<1x32x256xf32>
    %5 = vector.shape_cast %4 : vector<1x32x256xf32> to vector<32x256xf32>
    %cst = arith.constant dense<0.000000e+00> : vector<32xf32>
    %6 = vector.multi_reduction <add>, %5, %cst [1] : vector<32x256xf32> to vector<32xf32>
    %7 = vector.shape_cast %6 : vector<32xf32> to vector<32x1xf32>
    %8 = arith.addf %3, %7 : vector<32x1xf32>
    %c0_5 = arith.constant 0 : index
    %c0_6 = arith.constant 0 : index
    %9 = vector.load %arg8[%c0_5, %c0_6] : memref<32x1xf32, #tpu.memory_space<vmem>>, vector<32x1xf32>
    tpu.vector_store %arg8[%c0_5, %c0_6], %8 {strides = array<i32>} : memref<32x1xf32, #tpu.memory_space<vmem>>, vector<32x1xf32>,
    %c0_i32_7 = arith.constant 0 : i32
    %10 = arith.cmpi eq, %arg1, %c0_i32_7 : i32
    %11 = arith.extui %10 : i1 to i32
    %c0_i32_8 = arith.constant 0 : i32
    %12 = arith.cmpi ne, %11, %c0_i32_8 : i32
    scf.if %12 {
      %c0_9 = arith.constant 0 : index
      %c0_10 = arith.constant 0 : index
      %13 = vector.load %arg8[%c0_9, %c0_10] : memref<32x1xf32, #tpu.memory_space<vmem>>, vector<32x1xf32>
      %c0_11 = arith.constant 0 : index
      %c0_12 = arith.constant 0 : index
      %14 = vector.load %arg3[%c0_11, %c0_12] : memref<2x32xf32, #tpu.memory_space<vmem>>, vector<2x32xf32>
      %cst_13 = arith.constant dense<0.000000e+00> : vector<2x1xf32>
      %15 = tpu.matmul %14, %13, %cst_13 {dimension_numbers = #tpu.dot_dimension_numbers<[1], [0], [0], [1], [0, 0, 1, 1], [], []>} : vector<2x32xf32>, vector<32x1xf32>, vector<2x1xf32> -> vector<2x1xf32>
      %c0_14 = arith.constant 0 : index
      %c0_15 = arith.constant 0 : index
      %16 = vector.load %arg4[%c0_14, %c0_15] : memref<2x1xf32, #tpu.memory_space<vmem>>, vector<2x1xf32>
      %17 = arith.addf %15, %16 : vector<2x1xf32>
      %cst_16 = arith.constant 0.000000e+00 : f32
      %18 = vector.broadcast %cst_16 : f32 to vector<2x1xf32>
      %19 = arith.maximumf %17, %18 : vector<2x1xf32>
      %c0_17 = arith.constant 0 : index
      %c0_18 = arith.constant 0 : index
      %20 = vector.load %arg5[%c0_17, %c0_18] : memref<32x2xf32, #tpu.memory_space<vmem>>, vector<32x2xf32>
      %cst_19 = arith.constant dense<0.000000e+00> : vector<32x1xf32>
      %21 = tpu.matmul %20, %19, %cst_19 {dimension_numbers = #tpu.dot_dimension_numbers<[1], [0], [0], [1], [0, 0, 1, 1], [], []>} : vector<32x2xf32>, vector<2x1xf32>, vector<32x1xf32> -> vector<32x1xf32>
      %c0_20 = arith.constant 0 : index
      %c0_21 = arith.constant 0 : index
      %22 = vector.load %arg6[%c0_20, %c0_21] : memref<32x1xf32, #tpu.memory_space<vmem>>, vector<32x1xf32>
      %23 = arith.addf %21, %22 : vector<32x1xf32>
      %24 = arith.negf %23 : vector<32x1xf32>
      %25 = math.exp %24 : vector<32x1xf32>
      %cst_22 = arith.constant 1.000000e+00 : f32
      %26 = vector.broadcast %cst_22 : f32 to vector<32x1xf32>
      %27 = arith.addf %26, %25 : vector<32x1xf32>
      %28 = arith.divf %26, %27 : vector<32x1xf32>
      %c0_23 = arith.constant 0 : index
      %c0_24 = arith.constant 0 : index
      %c0_25 = arith.constant 0 : index
      %29 = vector.load %arg7[%c0_23, %c0_24, %c0_25] : memref<1x32x1xf32, #tpu.memory_space<vmem>>, vector<1x32x1xf32>
      %30 = vector.shape_cast %29 : vector<1x32x1xf32> to vector<32x1xf32>
      %31 = vector.shape_cast %28 : vector<32x1xf32> to vector<1x32x1xf32>
      tpu.vector_store %arg7[%c0_23, %c0_24, %c0_25], %31 {strides = array<i32>} : memref<1x32x1xf32, #tpu.memory_space<vmem>>, vector<1x32x1xf32>,
    } else {
    }
    return
  }
  func.func @transform_0(%arg0: i32, %arg1: i32) -> (i32, i32, i32) {
    %c0_i32 = arith.constant 0 : i32
    %c0_i32_0 = arith.constant 0 : i32
    return %arg0, %c0_i32, %arg1 : i32, i32, i32
  }
  func.func @transform_1(%arg0: i32, %arg1: i32) -> (i32, i32) {
    %c0_i32 = arith.constant 0 : i32
    %c0_i32_0 = arith.constant 0 : i32
    %c0_i32_1 = arith.constant 0 : i32
    return %c0_i32, %c0_i32_0 : i32, i32
  }
  func.func @transform_2(%arg0: i32, %arg1: i32) -> (i32, i32) {
    %c0_i32 = arith.constant 0 : i32
    %c0_i32_0 = arith.constant 0 : i32
    %c0_i32_1 = arith.constant 0 : i32
    return %c0_i32, %c0_i32_0 : i32, i32
  }
  func.func @transform_3(%arg0: i32, %arg1: i32) -> (i32, i32) {
    %c0_i32 = arith.constant 0 : i32
    %c0_i32_0 = arith.constant 0 : i32
    %c0_i32_1 = arith.constant 0 : i32
    return %c0_i32, %c0_i32_0 : i32, i32
  }
  func.func @transform_4(%arg0: i32, %arg1: i32) -> (i32, i32) {
    %c0_i32 = arith.constant 0 : i32
    %c0_i32_0 = arith.constant 0 : i32
    %c0_i32_1 = arith.constant 0 : i32
    return %c0_i32, %c0_i32_0 : i32, i32
  }
  func.func @transform_5(%arg0: i32, %arg1: i32) -> (i32, i32, i32) {
    %c0_i32 = arith.constant 0 : i32
    %c0_i32_0 = arith.constant 0 : i32
    %c0_i32_1 = arith.constant 0 : i32
    return %arg0, %c0_i32, %c0_i32_0 : i32, i32, i32
  }
}

</mosaic_0001>

<llo_original>
// kernel: tpu_custom_call.1
$region0: #{tpu_custom_call.1}
  #allocation0 [shape = 'u32[]', space=smem, size = 0x4, offset = 0x4, fixed_abs, tag = 'smem constant byte address 0x4 - core index']
  #allocation1 [shape = 'u32[144,128]{1,0:T(1,128)}', space=vmem, size = 0x12000, scoped, tag = 'internal scratch']
  #allocation2 [shape = 'f32[32,1]{1,0:T(8,128)}', space=vmem, size = 0x4000, scoped, tag = 'scratch operand']
  %s0 = inlined_call_operand.hbm [shape: f32[2,32,256], index: 0, kind: input, shape index: {}]
  %s1 = inlined_call_operand.vmem [shape: f32[2,32], index: 1, kind: input, shape index: {}]
  %s2 = inlined_call_operand.vmem [shape: f32[2,1], index: 2, kind: input, shape index: {}]
  %s3 = inlined_call_operand.vmem [shape: f32[32,2], index: 3, kind: input, shape index: {}]
  %s4 = inlined_call_operand.vmem [shape: f32[32,1], index: 4, kind: input, shape index: {}]
  %s5 = inlined_call_operand.vmem [shape: f32[2,32,1], index: 5, kind: output, shape index: {}]
  %s6 = sld [smem:[#allocation0]]
  $region65: #{tpu_custom_call.1} parent=0
    _
  %s8 = ssub.s32 1, %s6
  %s9 = scalar_select 0, %s8, %s6
  $region1: #{tpu_custom_call.1} parent=0
    #allocation3 [shape = 'u8[65536]{0}', space=vmem, size = 0x10000, scoped, tag = 'input window, operand 0']
    #allocation4 [shape = 's32[2]{0}', space=sflag, size = 0x8, scoped, tag = 'scoped memory for tpu_custom_call.1']
    %10 = vsyncpa [#allocation4], 0
    %s11 = scalar_lea.sflag [#allocation4], 1
    %12 = vsyncpa %s11, 0
    loop: start=0, step=1, limit=4
    $region2: #{tpu_custom_call.1} parent=1 // loop_pre_header
      _
    $region3: #{tpu_custom_call.1} parent=1 // loop_header
      %s14 = sphi 0, %s18
      %p15 = scmp.ge.s32.totalorder %s14, 4
      %s21 = sphi 0, %s33
      %s22 = sphi 0, %s29
      %s23 = sphi 0, %s21
      %s24 = sphi 0, %s22
      %s25 = sphi 0, %s23
      %s26 = sphi 0, %s24
      %s38 = sphi 0, %s40
      %s41 = sphi 0, %s38
      %s42 = sphi 0, %s41
      %s58 = sphi 0, %s42
      %s62 = sphi 0, %s62
      %s64 = sphi 0, %s62
      %s65 = sphi 0, %s64
      %s79 = sphi 0, %s65
      %s83 = sphi 0, %s83
      %s85 = sphi 0, %s83
      %s86 = sphi 0, %s85
      %s100 = sphi 0, %s86
      %s104 = sphi 0, %s104
      %s106 = sphi 0, %s104
      %s107 = sphi 0, %s106
      %s121 = sphi 0, %s107
      %s125 = sphi 0, %s125
      %s127 = sphi 0, %s125
      %s128 = sphi 0, %s127
      %s142 = sphi 0, %s128
      %s148 = sphi 0, %s150
      %s151 = sphi 0, %s148
      %s152 = sphi 0, %s151
      %s168 = sphi 0, %s152
    $region4: #{tpu_custom_call.1} parent=1 // loop_header_branch
      %17 = sbr.rel (%p15) target = $region8
    $region5: #{tpu_custom_call.1} parent=1 // loop_body
      %s19 = ssub.s32 %s14, 1
      %s20 = ssub.s32 %s14, 2
      %s27 = sadd.s32 1, %s22
      %p28 = scmp.ge.s32.totalorder %s27, 1
      %s29 = scalar_select %p28, 0, %s27
      %s30 = sadd.s32 1, %s21
      %s31 = scalar_select %p28, %s30, %s21
      %p32 = scmp.ge.s32.totalorder %s31, 2
      %s33 = scalar_select %p32, 0, %s31
      %s34 = ssub.s32 %s21, %s33
      %s35 = ssub.s32 %s22, %s29
      %s36 = sor.u32 %s34, %s35
      %p37 = scmp.eq.s32.totalorder %s36, 0
      %s39 = sadd.s32 %s38, 1
      %s40 = scalar_select %p37, %s38, %s39
      %p43 = pneg %p37
      %p44 = scmp.eq.s32.totalorder %s14, 1
      %p45 = por %p43, %p44
      %p46 = scmp.ne.s32.totalorder %s38, %s41
      %p47 = scmp.eq.s32.totalorder %s14, 0
      %p48 = por %p46, %p47
      %p49 = scmp.ne.s32.totalorder %s38, %s41
      %p50 = scmp.eq.s32.totalorder %s19, 1
      %p51 = por %p49, %p50
      %p52 = scmp.ne.s32.totalorder %s41, %s42
      %p53 = scmp.eq.s32.totalorder %s19, 0
      %p54 = por %p52, %p53
      %p55 = scmp.ne.s32.totalorder %s41, %s42
      %p56 = scmp.eq.s32.totalorder %s20, 1
      %p57 = por %p55, %p56
      %p59 = scmp.ne.s32.totalorder %s42, %s58
      %p60 = scmp.eq.s32.totalorder %s20, 0
      %p61 = por %p59, %p60
      %s63 = sadd.s32 %s62, 1
      %p66 = scmp.eq.s32.totalorder %s14, 1
      %p67 = scmp.ne.s32.totalorder %s62, %s64
      %p68 = scmp.eq.s32.totalorder %s14, 0
      %p69 = por %p67, %p68
      %p70 = scmp.ne.s32.totalorder %s62, %s64
      %p71 = scmp.eq.s32.totalorder %s19, 1
      %p72 = por %p70, %p71
      %p73 = scmp.ne.s32.totalorder %s64, %s65
      %p74 = scmp.eq.s32.totalorder %s19, 0
      %p75 = por %p73, %p74
      %p76 = scmp.ne.s32.totalorder %s64, %s65
      %p77 = scmp.eq.s32.totalorder %s20, 1
      %p78 = por %p76, %p77
      %p80 = scmp.ne.s32.totalorder %s65, %s79
      %p81 = scmp.eq.s32.totalorder %s20, 0
      %p82 = por %p80, %p81
      %s84 = sadd.s32 %s83, 1
      %p87 = scmp.eq.s32.totalorder %s14, 1
      %p88 = scmp.ne.s32.totalorder %s83, %s85
      %p89 = scmp.eq.s32.totalorder %s14, 0
      %p90 = por %p88, %p89
      %p91 = scmp.ne.s32.totalorder %s83, %s85
      %p92 = scmp.eq.s32.totalorder %s19, 1
      %p93 = por %p91, %p92
      %p94 = scmp.ne.s32.totalorder %s85, %s86
      %p95 = scmp.eq.s32.totalorder %s19, 0
      %p96 = por %p94, %p95
      %p97 = scmp.ne.s32.totalorder %s85, %s86
      %p98 = scmp.eq.s32.totalorder %s20, 1
      %p99 = por %p97, %p98
      %p101 = scmp.ne.s32.totalorder %s86, %s100
      %p102 = scmp.eq.s32.totalorder %s20, 0
      %p103 = por %p101, %p102
      %s105 = sadd.s32 %s104, 1
      %p108 = scmp.eq.s32.totalorder %s14, 1
      %p109 = scmp.ne.s32.totalorder %s104, %s106
      %p110 = scmp.eq.s32.totalorder %s14, 0
      %p111 = por %p109, %p110
      %p112 = scmp.ne.s32.totalorder %s104, %s106
      %p113 = scmp.eq.s32.totalorder %s19, 1
      %p114 = por %p112, %p113
      %p115 = scmp.ne.s32.totalorder %s106, %s107
      %p116 = scmp.eq.s32.totalorder %s19, 0
      %p117 = por %p115, %p116
      %p118 = scmp.ne.s32.totalorder %s106, %s107
      %p119 = scmp.eq.s32.totalorder %s20, 1
      %p120 = por %p118, %p119
      %p122 = scmp.ne.s32.totalorder %s107, %s121
      %p123 = scmp.eq.s32.totalorder %s20, 0
      %p124 = por %p122, %p123
      %s126 = sadd.s32 %s125, 1
      %p129 = scmp.eq.s32.totalorder %s14, 1
      %p130 = scmp.ne.s32.totalorder %s125, %s127
      %p131 = scmp.eq.s32.totalorder %s14, 0
      %p132 = por %p130, %p131
      %p133 = scmp.ne.s32.totalorder %s125, %s127
      %p134 = scmp.eq.s32.totalorder %s19, 1
      %p135 = por %p133, %p134
      %p136 = scmp.ne.s32.totalorder %s127, %s128
      %p137 = scmp.eq.s32.totalorder %s19, 0
      %p138 = por %p136, %p137
      %p139 = scmp.ne.s32.totalorder %s127, %s128
      %p140 = scmp.eq.s32.totalorder %s20, 1
      %p141 = por %p139, %p140
      %p143 = scmp.ne.s32.totalorder %s128, %s142
      %p144 = scmp.eq.s32.totalorder %s20, 0
      %p145 = por %p143, %p144
      %s146 = ssub.s32 %s21, %s33
      %p147 = scmp.eq.s32.totalorder %s146, 0
      %s149 = sadd.s32 %s148, 1
      %s150 = scalar_select %p147, %s148, %s149
      %p153 = pneg %p147
      %p154 = scmp.eq.s32.totalorder %s14, 1
      %p155 = por %p153, %p154
      %p156 = scmp.ne.s32.totalorder %s148, %s151
      %p157 = scmp.eq.s32.totalorder %s14, 0
      %p158 = por %p156, %p157
      %p159 = scmp.ne.s32.totalorder %s148, %s151
      %p160 = scmp.eq.s32.totalorder %s19, 1
      %p161 = por %p159, %p160
      %p162 = scmp.ne.s32.totalorder %s151, %s152
      %p163 = scmp.eq.s32.totalorder %s19, 0
      %p164 = por %p162, %p163
      %p165 = scmp.ne.s32.totalorder %s151, %s152
      %p166 = scmp.eq.s32.totalorder %s20, 1
      %p167 = por %p165, %p166
      %p169 = scmp.ne.s32.totalorder %s152, %s168
      %p170 = scmp.eq.s32.totalorder %s20, 0
      %p171 = por %p169, %p170
      %p172 = scmp.le.s32.totalorder 1, %s14
      %p173 = scmp.lt.s32.totalorder %s14, 3
      %p174 = pnand %p172, %p173
      %p175 = pneg %p174
      // Predicated region
      $region9: #{tpu_custom_call.1} parent=5 // pred_check
        _
      $region10: #{tpu_custom_call.1} parent=5 // pred_check_branch
        %177 = sbr.rel (%p174) target = $region12
      $region11: #{tpu_custom_call.1} parent=5 // pred_region
        %s178 = ssub.s32 %s14, 1
        // Predicated region
        $region13: #{tpu_custom_call.1} parent=11 // pred_check
          %p179 = pneg %p75
        $region14: #{tpu_custom_call.1} parent=11 // pred_check_branch
          %181 = sbr.rel (%p179) target = $region16
        $region15: #{tpu_custom_call.1} parent=11 // pred_region
          _
        $region16: #{tpu_custom_call.1} parent=11 // pred_fallthru
          _
        // Predicated region
        $region17: #{tpu_custom_call.1} parent=11 // pred_check
          %p182 = pneg %p96
        $region18: #{tpu_custom_call.1} parent=11 // pred_check_branch
          %184 = sbr.rel (%p182) target = $region20
        $region19: #{tpu_custom_call.1} parent=11 // pred_region
          _
        $region20: #{tpu_custom_call.1} parent=11 // pred_fallthru
          _
        // Predicated region
        $region21: #{tpu_custom_call.1} parent=11 // pred_check
          %p185 = pneg %p117
        $region22: #{tpu_custom_call.1} parent=11 // pred_check_branch
          %187 = sbr.rel (%p185) target = $region24
        $region23: #{tpu_custom_call.1} parent=11 // pred_region
          _
        $region24: #{tpu_custom_call.1} parent=11 // pred_fallthru
          _
        // Predicated region
        $region25: #{tpu_custom_call.1} parent=11 // pred_check
          %p188 = pneg %p138
        $region26: #{tpu_custom_call.1} parent=11 // pred_check_branch
          %190 = sbr.rel (%p188) target = $region28
        $region27: #{tpu_custom_call.1} parent=11 // pred_region
          _
        $region28: #{tpu_custom_call.1} parent=11 // pred_fallthru
          _
      $region12: #{tpu_custom_call.1} parent=5 // pred_fallthru
        _
      %p191 = scmp.lt.s32.totalorder %s14, 2
      // Predicated region
      $region29: #{tpu_custom_call.1} parent=5 // pred_check
        %p192 = pneg %p191
      $region30: #{tpu_custom_call.1} parent=5 // pred_check_branch
        %194 = sbr.rel (%p192) target = $region32
      $region31: #{tpu_custom_call.1} parent=5 // pred_region
        // Predicated region
        $region33: #{tpu_custom_call.1} parent=31 // pred_check
          %p195 = pneg %p48
        $region34: #{tpu_custom_call.1} parent=31 // pred_check_branch
          %197 = sbr.rel (%p195) target = $region36
        $region35: #{tpu_custom_call.1} parent=31 // pred_region
          %s198 = sand.u32 %s38, 1
          %s199 = scalar_lea.sflag [#allocation4], %s198
          %s200 = sand.u32 %s38, 1
          %s201 = smul.addr %s200, 64
          %s202 = scalar_lea.vmem [#allocation3], %s201
          %s203 = smul.u32 2, %s22
          %s205 = ssub.s32 1024, 1024
          %206 = vsyncadd %s199, %s205
          %s207 = smul.addr %s21, 8
          %s208 = sadd.s32 %s203, %s207
          %s209 = smul.addr %s208, 128
          %s210 = scalar_lea.hbm %s0, %s209
          %s211 = sshll.u32 %s202, 4
          %s212 = int_to_ptr.vmem [resolvable:$true] %s211
          %217 = dma.hbm_to_vmem [thread:$0]  %s210, 1024, %s212, %s199, 256, 256, 16
        $region36: #{tpu_custom_call.1} parent=31 // pred_fallthru
          _
      $region32: #{tpu_custom_call.1} parent=5 // pred_fallthru
        _
      %p218 = scmp.le.s32.totalorder 1, %s14
      %p219 = scmp.lt.s32.totalorder %s14, 3
      %p220 = pnand %p218, %p219
      %p221 = pneg %p220
      // Predicated region
      $region37: #{tpu_custom_call.1} parent=5 // pred_check
        _
      $region38: #{tpu_custom_call.1} parent=5 // pred_check_branch
        %223 = sbr.rel (%p220) target = $region40
      $region39: #{tpu_custom_call.1} parent=5 // pred_region
        %s224 = ssub.s32 %s14, 1
        %s225 = sand.u32 %s41, 1
        %s226 = scalar_lea.sflag [#allocation4], %s225
        %s227 = sand.u32 %s41, 1
        %s228 = smul.addr %s227, 64
        %s229 = scalar_lea.vmem [#allocation3], %s228
        // Predicated region
        $region41: #{tpu_custom_call.1} parent=39 // pred_check
          %p230 = pneg %p54
        $region42: #{tpu_custom_call.1} parent=39 // pred_check_branch
          %232 = sbr.rel (%p230) target = $region44
        $region43: #{tpu_custom_call.1} parent=39 // pred_region
          %233 = dma.done %s226, 1024
        $region44: #{tpu_custom_call.1} parent=39 // pred_fallthru
          _
        %s234 = sand.u32 %s41, 1
        %s235 = scalar_lea.sflag [#allocation4], %s234
        %s236 = sand.u32 %s41, 1
        %s237 = smul.addr %s236, 64
        %s238 = scalar_lea.vmem [#allocation3], %s237
        %p239 = pneg %p54
        %p240 = pneg %p51
        %p241 = pneg %p75
        %p242 = pneg %p72
        %p243 = pneg %p96
        %p244 = pneg %p93
        %p245 = pneg %p117
        %p246 = pneg %p114
        %p247 = pneg %p138
        %p248 = pneg %p135
        %p249 = pneg %p164
        %p250 = pneg %p161
        %p251 = scmp.lt.s32.totalorder %s23, 1
        %s252 = scalar_select %p251, %s23, 1
        %s253 = smul.addr %s252, 4
        %s254 = smul.addr %s253, 8
        %s255 = scalar_lea.vmem %s5, %s254
        %s256 = smul.u32 2, %s24
        %p257 = scmp.lt.s32.totalorder %s23, 1
        %s258 = scalar_select %p257, %s23, 1
        %s259 = smul.addr %s258, 4
        %s260 = smul.addr %s259, 8
        %s261 = scalar_lea.vmem %s5, %s260
        %p262 = scmp.eq.s32.totalorder %s24, 0
        // Predicated region
        $region45: #{tpu_custom_call.1} parent=39 // pred_check
          %p263 = pneg %p262
        $region46: #{tpu_custom_call.1} parent=39 // pred_check_branch
          %265 = sbr.rel (%p263) target = $region48
        $region47: #{tpu_custom_call.1} parent=39 // pred_region
          %vm266 = vcmask 7168
          %267 = vst.msk [vmem:[#allocation2] sm:$0xff] %vm266, 0.0
          %268 = vst.msk [vmem:[#allocation2 + $0x8] sm:$0xff] %vm266, 0.0
          %269 = vst.msk [vmem:[#allocation2 + $0x10] sm:$0xff] %vm266, 0.0
          %270 = vst.msk [vmem:[#allocation2 + $0x18] sm:$0xff] %vm266, 0.0
        $region48: #{tpu_custom_call.1} parent=39 // pred_fallthru
          _
        %v271 = vld [vmem:[#allocation2] sm:$0xff]
        %v272 = vld [vmem:[#allocation2 + $0x8] sm:$0xff]
        %v273 = vld [vmem:[#allocation2 + $0x10] sm:$0xff]
        %v274 = vld [vmem:[#allocation2 + $0x18] sm:$0xff]
        %v275 = vld [vmem:[%s229] sm:$0xff]
        %v276 = vld [vmem:[%s229 + $0x8] sm:$0xff]
        %v277 = vld [vmem:[%s229 + $0x10] sm:$0xff]
        %v278 = vld [vmem:[%s229 + $0x18] sm:$0xff]
        %v279 = vld [vmem:[%s229 + $0x20] sm:$0xff]
        %v280 = vld [vmem:[%s229 + $0x28] sm:$0xff]
        %v281 = vld [vmem:[%s229 + $0x30] sm:$0xff]
        %v282 = vld [vmem:[%s229 + $0x38] sm:$0xff]
        %v283 = vadd.f32 %v275, %v276
        %284 = vadd.xlane.f32.xlu0 %v283
        %v285 = vpop.xlane.xlu0 %284
        %v286 = vadd.f32 %v277, %v278
        %287 = vadd.xlane.f32.xlu0 %v286
        %v288 = vpop.xlane.xlu0 %287
        %v289 = vadd.f32 %v279, %v280
        %290 = vadd.xlane.f32.xlu0 %v289
        %v291 = vpop.xlane.xlu0 %290
        %v292 = vadd.f32 %v281, %v282
        %293 = vadd.xlane.f32.xlu0 %v292
        %v294 = vpop.xlane.xlu0 %293
        %v295 = vadd.f32 %v271, %v285
        %v296 = vadd.f32 %v272, %v288
        %v297 = vadd.f32 %v273, %v291
        %v298 = vadd.f32 %v274, %v294
        %vm299 = vcmask 7168
        %300 = vst.msk [vmem:[#allocation2] sm:$0xff] %vm299, %v295
        %301 = vst.msk [vmem:[#allocation2 + $0x8] sm:$0xff] %vm299, %v296
        %302 = vst.msk [vmem:[#allocation2 + $0x10] sm:$0xff] %vm299, %v297
        %303 = vst.msk [vmem:[#allocation2 + $0x18] sm:$0xff] %vm299, %v298
        // Predicated region
        $region49: #{tpu_custom_call.1} parent=39 // pred_check
          %p304 = pneg %p262
        $region50: #{tpu_custom_call.1} parent=39 // pred_check_branch
          %306 = sbr.rel (%p304) target = $region52
        $region51: #{tpu_custom_call.1} parent=39 // pred_region
          %v307 = vld [vmem:[#allocation2] sm:$0xff]
          %v308 = vld [vmem:[#allocation2 + $0x8] sm:$0xff]
          %v309 = vld [vmem:[#allocation2 + $0x10] sm:$0xff]
          %v310 = vld [vmem:[#allocation2 + $0x18] sm:$0xff]
          %v311 = vld [vmem:[%s1] sm:$0x3]
          %v312 = vld [vmem:[%s2] sm:$0x3]
          %vm313 = vcmask 261120
          %v315 = vsel %vm313, %v311, 0
          %317 = vmatprep.subr.mxu0 0.0
          %318 = vmatpush1.msra.mxu0 %v307
          %319 = vmatprep.subr.mxu0 0.0
          %320 = vmatpush1.msra.mxu0 %v308
          %321 = vmatprep.subr.mxu0 0.0
          %322 = vmatpush1.msra.mxu0 %v309
          %323 = vmatprep.subr.mxu0 0.0
          %324 = vmatpush1.msra.mxu0 %v310
          %325 = vmatprep.subr.mxu0 0.0
          %326 = vmatpush1.msra.mxu0 0.0
          %327 = vmatprep.subr.mxu0 0.0
          %328 = vmatpush1.msra.mxu0 0.0
          %329 = vmatprep.subr.mxu0 0.0
          %330 = vmatpush1.msra.mxu0 0.0
          %331 = vmatprep.subr.mxu0 0.0
          %332 = vmatpush1.msra.mxu0 0.0
          %333 = vmatprep.subr.mxu0 0.0
          %334 = vmatpush1.msra.mxu0 0.0
          %335 = vmatprep.subr.mxu0 0.0
          %336 = vmatpush1.msra.mxu0 0.0
          %337 = vmatprep.subr.mxu0 0.0
          %338 = vmatpush1.msra.mxu0 0.0
          %339 = vmatprep.subr.mxu0 0.0
          %340 = vmatpush1.msra.mxu0 0.0
          %341 = vmatprep.subr.mxu0 0.0
          %342 = vmatpush1.msra.mxu0 0.0
          %343 = vmatprep.subr.mxu0 0.0
          %344 = vmatpush1.msra.mxu0 0.0
          %345 = vmatprep.subr.mxu0 0.0
          %346 = vmatpush1.msra.mxu0 0.0
          %347 = vmatprep.subr.mxu0 0.0
          %348 = vmatpush1.msra.mxu0 0.0
          %349 = vmatprep.subr.mxu0 0.0
          %350 = vmatpush1.msra.mxu0 0.0
          %351 = vmatprep.subr.mxu0 0.0
          %352 = vmatpush1.msra.mxu0 0.0
          %353 = vmatprep.subr.mxu0 0.0
          %354 = vmatpush1.msra.mxu0 0.0
          %355 = vmatprep.subr.mxu0 0.0
          %356 = vmatpush1.msra.mxu0 0.0
          %357 = vmatprep.subr.mxu0 0.0
          %358 = vmatpush1.msra.mxu0 0.0
          %359 = vmatprep.subr.mxu0 0.0
          %360 = vmatpush1.msra.mxu0 0.0
          %361 = vmatprep.subr.mxu0 0.0
          %362 = vmatpush1.msra.mxu0 0.0
          %363 = vmatprep.subr.mxu0 0.0
          %364 = vmatpush1.msra.mxu0 0.0
          %365 = vmatprep.subr.mxu0 0.0
          %366 = vmatpush1.msra.mxu0 0.0
          %367 = vmatprep.subr.mxu0 0.0
          %368 = vmatpush1.msra.mxu0 0.0
          %369 = vmatprep.subr.mxu0 0.0
          %370 = vmatpush1.msra.mxu0 0.0
          %371 = vmatprep.subr.mxu0 0.0
          %372 = vmatpush1.msra.mxu0 0.0
          %373 = vmatprep.subr.mxu0 0.0
          %374 = vmatpush1.msra.mxu0 0.0
          %375 = vmatprep.subr.mxu0 0.0
          %376 = vmatpush1.msra.mxu0 0.0
          %377 = vmatprep.subr.mxu0 0.0
          %378 = vmatpush1.msra.mxu0 0.0
          %379 = vmatprep.subr.mxu0 0.0
          %380 = vmatpush1.msra.mxu0 0.0
          %381 = vmatprep.mubr.f32.mxu0 0.0
          %382 = vmatmul.mubr.f32.gmra.mrb[0].mxu0 %v315
          %v383 = vpop.f32.mrb[0].mxu0
          %v384 = vadd.f32 %v312, %v383
          %v385 = vpop.f32.mrb[0].mxu0
          %386 = vdwg.mxu0
          %v387 = vmax.f32 %v384, 0.0
          %v388 = vld [vmem:[%s3] sm:$0xff]
          %v389 = vld [vmem:[%s3 + $0x8] sm:$0xff]
          %v390 = vld [vmem:[%s3 + $0x10] sm:$0xff]
          %v391 = vld [vmem:[%s3 + $0x18] sm:$0xff]
          %v392 = vld [vmem:[%s4] sm:$0xff]
          %v393 = vld [vmem:[%s4 + $0x8] sm:$0xff]
          %v394 = vld [vmem:[%s4 + $0x10] sm:$0xff]
          %v395 = vld [vmem:[%s4 + $0x18] sm:$0xff]
          %vm396 = vcmask 15360
          %v398 = vsel %vm396, %v388, 0
          %v401 = vsel %vm396, %v389, 0
          %v404 = vsel %vm396, %v390, 0
          %v407 = vsel %vm396, %v391, 0
          %vm409 = vcmask 1041408
          %v411 = vsel %vm409, %v387, 0
          %413 = vmatprep.subr.mxu0 0.0
          %414 = vmatpush1.msra.mxu0 %v411
          %415 = vmatprep.subr.mxu0 0.0
          %416 = vmatpush1.msra.mxu0 0.0
          %417 = vmatprep.subr.mxu0 0.0
          %418 = vmatpush1.msra.mxu0 0.0
          %419 = vmatprep.subr.mxu0 0.0
          %420 = vmatpush1.msra.mxu0 0.0
          %421 = vmatprep.subr.mxu0 0.0
          %422 = vmatpush1.msra.mxu0 0.0
          %423 = vmatprep.subr.mxu0 0.0
          %424 = vmatpush1.msra.mxu0 0.0
          %425 = vmatprep.subr.mxu0 0.0
          %426 = vmatpush1.msra.mxu0 0.0
          %427 = vmatprep.subr.mxu0 0.0
          %428 = vmatpush1.msra.mxu0 0.0
          %429 = vmatprep.subr.mxu0 0.0
          %430 = vmatpush1.msra.mxu0 0.0
          %431 = vmatprep.subr.mxu0 0.0
          %432 = vmatpush1.msra.mxu0 0.0
          %433 = vmatprep.subr.mxu0 0.0
          %434 = vmatpush1.msra.mxu0 0.0
          %435 = vmatprep.subr.mxu0 0.0
          %436 = vmatpush1.msra.mxu0 0.0
          %437 = vmatprep.subr.mxu0 0.0
          %438 = vmatpush1.msra.mxu0 0.0
          %439 = vmatprep.subr.mxu0 0.0
          %440 = vmatpush1.msra.mxu0 0.0
          %441 = vmatprep.subr.mxu0 0.0
          %442 = vmatpush1.msra.mxu0 0.0
          %443 = vmatprep.subr.mxu0 0.0
          %444 = vmatpush1.msra.mxu0 0.0
          %445 = vmatprep.subr.mxu0 0.0
          %446 = vmatpush1.msra.mxu0 0.0
          %447 = vmatprep.subr.mxu0 0.0
          %448 = vmatpush1.msra.mxu0 0.0
          %449 = vmatprep.subr.mxu0 0.0
          %450 = vmatpush1.msra.mxu0 0.0
          %451 = vmatprep.subr.mxu0 0.0
          %452 = vmatpush1.msra.mxu0 0.0
          %453 = vmatprep.subr.mxu0 0.0
          %454 = vmatpush1.msra.mxu0 0.0
          %455 = vmatprep.subr.mxu0 0.0
          %456 = vmatpush1.msra.mxu0 0.0
          %457 = vmatprep.subr.mxu0 0.0
          %458 = vmatpush1.msra.mxu0 0.0
          %459 = vmatprep.subr.mxu0 0.0
          %460 = vmatpush1.msra.mxu0 0.0
          %461 = vmatprep.subr.mxu0 0.0
          %462 = vmatpush1.msra.mxu0 0.0
          %463 = vmatprep.subr.mxu0 0.0
          %464 = vmatpush1.msra.mxu0 0.0
          %465 = vmatprep.subr.mxu0 0.0
          %466 = vmatpush1.msra.mxu0 0.0
          %467 = vmatprep.subr.mxu0 0.0
          %468 = vmatpush1.msra.mxu0 0.0
          %469 = vmatprep.subr.mxu0 0.0
          %470 = vmatpush1.msra.mxu0 0.0
          %471 = vmatprep.subr.mxu0 0.0
          %472 = vmatpush1.msra.mxu0 0.0
          %473 = vmatprep.subr.mxu0 0.0
          %474 = vmatpush1.msra.mxu0 0.0
          %475 = vmatprep.subr.mxu0 0.0
          %476 = vmatpush1.msra.mxu0 0.0
          %477 = vmatprep.mubr.f32.mxu0 0.0
          %478 = vmatmul.mubr.f32.gmra.mrb[0].mxu0 %v398
          %v479 = vpop.f32.mrb[0].mxu0
          %v480 = vadd.f32 %v392, %v479
          %v481 = vpop.f32.mrb[0].mxu0
          %482 = vmatprep.mubr.f32.mxu0 0.0
          %483 = vmatmul.mubr.f32.gmra.mrb[0].mxu0 %v401
          %v484 = vpop.f32.mrb[0].mxu0
          %v485 = vadd.f32 %v393, %v484
          %v486 = vpop.f32.mrb[0].mxu0
          %487 = vmatprep.mubr.f32.mxu0 0.0
          %488 = vmatmul.mubr.f32.gmra.mrb[0].mxu0 %v404
          %v489 = vpop.f32.mrb[0].mxu0
          %v490 = vadd.f32 %v394, %v489
          %v491 = vpop.f32.mrb[0].mxu0
          %492 = vmatprep.mubr.f32.mxu0 0.0
          %493 = vmatmul.mubr.f32.gmra.mrb[0].mxu0 %v407
          %v494 = vpop.f32.mrb[0].mxu0
          %v495 = vadd.f32 %v395, %v494
          %v496 = vpop.f32.mrb[0].mxu0
          %497 = vdwg.mxu0
          %v498 = vxor.u32 %v480, 2147483648
          %v499 = vxor.u32 %v485, 2147483648
          %v500 = vxor.u32 %v490, 2147483648
          %v501 = vxor.u32 %v495, 2147483648
          %v502 = vmul.f32 %v498, 1.442695
          %v503 = vpow.pop %v502
          %v504 = vmul.f32 %v499, 1.442695
          %v505 = vpow.pop %v504
          %v506 = vmul.f32 %v500, 1.442695
          %v507 = vpow.pop %v506
          %v508 = vmul.f32 %v501, 1.442695
          %v509 = vpow.pop %v508
          %v510 = vadd.f32 %v503, 1.0
          %v511 = vadd.f32 %v505, 1.0
          %v512 = vadd.f32 %v507, 1.0
          %v513 = vadd.f32 %v509, 1.0
          %v514 = vrcp.pop %v510
          %v515 = vmul.f32 1.0, %v514
          %v516 = vrcp.pop %v511
          %v517 = vmul.f32 1.0, %v516
          %v518 = vrcp.pop %v512
          %v519 = vmul.f32 1.0, %v518
          %v520 = vrcp.pop %v513
          %v521 = vmul.f32 1.0, %v520
          %522 = vst.msk [vmem:[%s261] sm:$0xff] %vm299, %v515
          %523 = vst.msk [vmem:[%s261 + $0x8] sm:$0xff] %vm299, %v517
          %524 = vst.msk [vmem:[%s261 + $0x10] sm:$0xff] %vm299, %v519
          %525 = vst.msk [vmem:[%s261 + $0x18] sm:$0xff] %vm299, %v521
        $region52: #{tpu_custom_call.1} parent=39 // pred_fallthru
          _
        %p526 = scmp.lt.s32.totalorder %s23, 1
        %s527 = scalar_select %p526, %s23, 1
        %s528 = smul.addr %s527, 4
        %s529 = smul.addr %s528, 8
        %s530 = scalar_lea.vmem %s5, %s529
        // Predicated region
        $region53: #{tpu_custom_call.1} parent=39 // pred_check
          %p531 = pneg %p161
        $region54: #{tpu_custom_call.1} parent=39 // pred_check_branch
          %533 = sbr.rel (%p531) target = $region56
        $region55: #{tpu_custom_call.1} parent=39 // pred_region
          _
        $region56: #{tpu_custom_call.1} parent=39 // pred_fallthru
          _
      $region40: #{tpu_custom_call.1} parent=5 // pred_fallthru
        _
      %p534 = scmp.le.s32.totalorder 2, %s14
      // Predicated region
      $region57: #{tpu_custom_call.1} parent=5 // pred_check
        %p535 = pneg %p534
      $region58: #{tpu_custom_call.1} parent=5 // pred_check_branch
        %537 = sbr.rel (%p535) target = $region60
      $region59: #{tpu_custom_call.1} parent=5 // pred_region
        %s538 = ssub.s32 %s14, 2
        // Predicated region
        $region61: #{tpu_custom_call.1} parent=59 // pred_check
          %p539 = pneg %p167
        $region62: #{tpu_custom_call.1} parent=59 // pred_check_branch
          %541 = sbr.rel (%p539) target = $region64
        $region63: #{tpu_custom_call.1} parent=59 // pred_region
          %p542 = scmp.lt.s32.totalorder %s25, 1
          %s543 = scalar_select %p542, %s25, 1
          %s544 = smul.addr %s543, 4
          %s545 = smul.addr %s544, 8
          %s546 = scalar_lea.vmem %s5, %s545
        $region64: #{tpu_custom_call.1} parent=59 // pred_fallthru
          _
      $region60: #{tpu_custom_call.1} parent=5 // pred_fallthru
        _
    $region6: #{tpu_custom_call.1} parent=1 // loop_footer
      %s18 = sadd.s32 1, %s14
    $region7: #{tpu_custom_call.1} parent=1 // loop_footer_branch
      %13 = sbr.rel target = $region3
    $region8: #{tpu_custom_call.1} parent=1 // loop_exit
      _
    %547 = vsyncpa [#allocation4], 1
    %s548 = scalar_lea.sflag [#allocation4], 1
    %549 = vsyncpa %s548, 1

</llo_original>
